<compile_context>
chip_gen: v6e
topology: v6e:2x2x1
jax: 0.10.0
libtpu: 0.0.40
codegen_flags: <defaults>
</compile_context>

<pallas_src>
import functools

import jax
import jax.numpy as jnp
from jax.experimental import pallas as pl
from jax.experimental.pallas import tpu as pltpu


def _round_up(x, m):
    return ((x + m - 1) // m) * m


def _mlp_kernel(x_ref, w1_ref, b1_ref, w2_ref, b2_ref, o_ref):
    # Layer 1: x @ W1 + b1, ReLU  (MXU matmul, f32 accumulate)
    h = jnp.dot(x_ref[...], w1_ref[...], preferred_element_type=jnp.float32)
    h = jnp.maximum(h + b1_ref[...], 0.0)
    # Layer 2: h @ W2 + b2
    out = jnp.dot(h.astype(w2_ref.dtype), w2_ref[...],
                  preferred_element_type=jnp.float32)
    o_ref[...] = (out + b2_ref[...]).astype(o_ref.dtype)


def _mlp_dropout_kernel(x_ref, w1_ref, b1_ref, w2_ref, b2_ref, m_ref, o_ref):
    h = jnp.dot(x_ref[...], w1_ref[...], preferred_element_type=jnp.float32)
    h = jnp.maximum(h + b1_ref[...], 0.0)
    h = h * m_ref[...]  # pre-scaled keep mask in f32: 0 or 1/(1-p)
    out = jnp.dot(h.astype(w2_ref.dtype), w2_ref[...],
                  preferred_element_type=jnp.float32)
    o_ref[...] = (out + b2_ref[...]).astype(o_ref.dtype)


@functools.partial(
    jax.jit,
    static_argnames=("dropout_p", "training", "block_b", "matmul_dtype"))
def basic_net_forward(x, w1, b1, w2, b2, rng_key=None, *,
                      dropout_p=0.5, training=False,
                      block_b=256, matmul_dtype=jnp.float32):
    """x: (B, d) f32. w1: (d, 128), b1: (128,), w2: (128, d), b2: (d,).

    Weights stored as (in_features, out_features): x @ W + b, numerically
    identical to PyTorch's x @ W_pt.T + b with W_pt of shape (out, in).
    """
    B, d = x.shape
    H = w1.shape[1]
    assert w1.shape == (d, H) and w2.shape == (H, d)
    assert b1.shape == (H,) and b2.shape == (d,)

    use_dropout = bool(training) and float(dropout_p) > 0.0
    if use_dropout and rng_key is None:
        raise ValueError("training=True with dropout_p>0 requires rng_key")

    # Pad feature dim to a lane-dense multiple of 128, batch to a multiple of
    # the batch tile (itself a multiple of 8 for sublane alignment).
    d_pad = _round_up(d, 128)
    TB = min(int(block_b), _round_up(B, 8))
    B_pad = _round_up(B, TB)

    mm_dt = jnp.dtype(matmul_dtype)
    x_p = jnp.zeros((B_pad, d_pad), mm_dt).at[:B, :d].set(x.astype(mm_dt))
    w1_p = jnp.zeros((d_pad, H), mm_dt).at[:d, :].set(w1.astype(mm_dt))
    w2_p = jnp.zeros((H, d_pad), mm_dt).at[:, :d].set(w2.astype(mm_dt))
    b1_p = b1.reshape(1, H).astype(jnp.float32)
    b2_p = jnp.zeros((1, d_pad), jnp.float32).at[:, :d].set(
        b2.astype(jnp.float32))

    grid = (B_pad // TB,)

    in_specs = [
        pl.BlockSpec((TB, d_pad), lambda i: (i, 0)),   # x tile (pipelined)
        pl.BlockSpec((d_pad, H), lambda i: (0, 0)),    # w1 (VMEM-resident)
        pl.BlockSpec((1, H), lambda i: (0, 0)),        # b1
        pl.BlockSpec((H, d_pad), lambda i: (0, 0)),    # w2
        pl.BlockSpec((1, d_pad), lambda i: (0, 0)),    # b2
    ]
    operands = [x_p, w1_p, b1_p, w2_p, b2_p]
    kernel = _mlp_kernel
    mask_bytes = 0

    if use_dropout:
        keep = jax.random.bernoulli(rng_key, 1.0 - float(dropout_p), (B_pad, H))
        mask = keep.astype(jnp.float32) * (1.0 / (1.0 - float(dropout_p)))
        in_specs.append(pl.BlockSpec((TB, H), lambda i: (i, 0)))
        operands.append(mask)
        kernel = _mlp_dropout_kernel
        mask_bytes = B_pad * H * 4

    itemsize = mm_dt.itemsize
    cost = pl.CostEstimate(
        flops=4 * B_pad * d_pad * H,          # two matmuls, 2*M*K*N each
        transcendentals=0,
        bytes_accessed=(B_pad * d_pad * itemsize        # x
                        + 2 * d_pad * H * itemsize      # w1 + w2
                        + (H + d_pad) * 4               # biases
                        + mask_bytes
                        + B_pad * d_pad * 4),           # output (f32)
    )

    out_p = pl.pallas_call(
        kernel,
        out_shape=jax.ShapeDtypeStruct((B_pad, d_pad), jnp.float32),
        grid=grid,
        in_specs=in_specs,
        out_specs=pl.BlockSpec((TB, d_pad), lambda i: (i, 0)),
        compiler_params=pltpu.CompilerParams(
            dimension_semantics=("parallel",)),
        cost_estimate=cost,
    )(*operands)

    return out_p[:B, :d].astype(x.dtype)


def init_params(key, d, hidden=128):
    """Deterministic init mimicking nn.Linear default (uniform +- 1/sqrt(fan_in))."""
    k1, k2, k3, k4 = jax.random.split(key, 4)
    bound1 = 1.0 / jnp.sqrt(d)
    bound2 = 1.0 / jnp.sqrt(hidden)
    w1 = jax.random.uniform(k1, (d, hidden), jnp.float32, -bound1, bound1)
    b1 = jax.random.uniform(k2, (hidden,), jnp.float32, -bound1, bound1)
    w2 = jax.random.uniform(k3, (hidden, d), jnp.float32, -bound2, bound2)
    b2 = jax.random.uniform(k4, (d,), jnp.float32, -bound2, bound2)
    return w1, b1, w2, b2


if __name__ == "__main__":
    key = jax.random.PRNGKey(0)
    kx, kp, kd = jax.random.split(key, 3)

    B, d = 8, 32
    x = jax.random.normal(kx, (B, d), dtype=jnp.float32)
    w1, b1, w2, b2 = init_params(kp, d)

    # Eval-mode forward (dropout = identity), matching module.eval() semantics.
    y = basic_net_forward(x, w1, b1, w2, b2, dropout_p=0.5, training=False)
    y = jax.block_until_ready(y)

    # Reference check in plain JAX (eval mode).
    ref = jnp.maximum(x @ w1 + b1, 0.0) @ w2 + b2
    assert jnp.allclose(y, ref, atol=1e-5, rtol=1e-5), "mismatch vs reference"

    # Training-mode forward: dropout mask generated with jax.random outside the
    # kernel and applied in-kernel. Check it matches a pure-JAX reference built
    # from the same mask.
    p = 0.5
    y_train = basic_net_forward(x, w1, b1, w2, b2, rng_key=kd,
                                dropout_p=p, training=True)
    y_train = jax.block_until_ready(y_train)
    B_pad = ((B + 7) // 8) * 8
    keep_ref = jax.random.bernoulli(kd, 1.0 - p, (B_pad, 128))[:B]
    h_ref = jnp.maximum(x @ w1 + b1, 0.0)
    h_ref = jnp.where(keep_ref, h_ref / (1.0 - p), 0.0)
    ref_train = h_ref @ w2 + b2
    assert jnp.allclose(y_train, ref_train, atol=1e-5, rtol=1e-5), \
        "training-mode mismatch vs reference"

    print("KERNEL_OK")
</pallas_src>

<mosaic_0001>
module attributes {stable_mosaic.version = 11 : i64} {
  func.func @_mlp_kernel(%arg0: i32, %arg1: memref<8x128xf32, #tpu.memory_space<vmem>>, %arg2: memref<128x128xf32, #tpu.memory_space<vmem>>, %arg3: memref<1x128xf32, #tpu.memory_space<vmem>>, %arg4: memref<128x128xf32, #tpu.memory_space<vmem>>, %arg5: memref<1x128xf32, #tpu.memory_space<vmem>>, %arg6: memref<8x128xf32, #tpu.memory_space<vmem>>) attributes {dimension_semantics = [#tpu.dimension_semantics<parallel>], iteration_bounds = array<i64: 1>, scalar_prefetch = 0 : i64, scratch_operands = 0 : i64, tpu.core_type = #tpu.core_type<tc>, window_params = [{transform_indices = @transform_0, window_bounds = array<i64: 8, 128>}, {pipeline_mode = #tpu.pipeline_mode<synchronous>, transform_indices = @transform_1, window_bounds = array<i64: 128, 128>}, {pipeline_mode = #tpu.pipeline_mode<synchronous>, transform_indices = @transform_2, window_bounds = array<i64: 1, 128>}, {pipeline_mode = #tpu.pipeline_mode<synchronous>, transform_indices = @transform_3, window_bounds = array<i64: 128, 128>}, {pipeline_mode = #tpu.pipeline_mode<synchronous>, transform_indices = @transform_4, window_bounds = array<i64: 1, 128>}, {transform_indices = @transform_5, window_bounds = array<i64: 8, 128>}]} {
    %c0 = arith.constant 0 : index
    %c0_0 = arith.constant 0 : index
    %0 = vector.load %arg1[%c0, %c0_0] : memref<8x128xf32, #tpu.memory_space<vmem>>, vector<8x128xf32>
    %c0_1 = arith.constant 0 : index
    %c0_2 = arith.constant 0 : index
    %1 = vector.load %arg2[%c0_1, %c0_2] : memref<128x128xf32, #tpu.memory_space<vmem>>, vector<128x128xf32>
    %cst = arith.constant dense<0.000000e+00> : vector<8x128xf32>
    %2 = tpu.matmul %0, %1, %cst {dimension_numbers = #tpu.dot_dimension_numbers<[1], [0], [0], [1], [0, 0, 1, 1], [], []>} : vector<8x128xf32>, vector<128x128xf32>, vector<8x128xf32> -> vector<8x128xf32>
    %c0_3 = arith.constant 0 : index
    %c0_4 = arith.constant 0 : index
    %3 = vector.load %arg3[%c0_3, %c0_4] : memref<1x128xf32, #tpu.memory_space<vmem>>, vector<1x128xf32>
    %4 = vector.broadcast %3 : vector<1x128xf32> to vector<8x128xf32>
    %5 = arith.addf %2, %4 : vector<8x128xf32>
    %cst_5 = arith.constant 0.000000e+00 : f32
    %6 = vector.broadcast %cst_5 : f32 to vector<8x128xf32>
    %7 = arith.maximumf %5, %6 : vector<8x128xf32>
    %c0_6 = arith.constant 0 : index
    %c0_7 = arith.constant 0 : index
    %8 = vector.load %arg4[%c0_6, %c0_7] : memref<128x128xf32, #tpu.memory_space<vmem>>, vector<128x128xf32>
    %cst_8 = arith.constant dense<0.000000e+00> : vector<8x128xf32>
    %9 = tpu.matmul %7, %8, %cst_8 {dimension_numbers = #tpu.dot_dimension_numbers<[1], [0], [0], [1], [0, 0, 1, 1], [], []>} : vector<8x128xf32>, vector<128x128xf32>, vector<8x128xf32> -> vector<8x128xf32>
    %c0_9 = arith.constant 0 : index
    %c0_10 = arith.constant 0 : index
    %10 = vector.load %arg5[%c0_9, %c0_10] : memref<1x128xf32, #tpu.memory_space<vmem>>, vector<1x128xf32>
    %11 = vector.broadcast %10 : vector<1x128xf32> to vector<8x128xf32>
    %12 = arith.addf %9, %11 : vector<8x128xf32>
    %c0_11 = arith.constant 0 : index
    %c0_12 = arith.constant 0 : index
    %13 = vector.load %arg6[%c0_11, %c0_12] : memref<8x128xf32, #tpu.memory_space<vmem>>, vector<8x128xf32>
    tpu.vector_store %arg6[%c0_11, %c0_12], %12 {strides = array<i32>} : memref<8x128xf32, #tpu.memory_space<vmem>>, vector<8x128xf32>,
    return
  }
  func.func @transform_0(%arg0: i32) -> (i32, i32) {
    %c0_i32 = arith.constant 0 : i32
    %c0_i32_0 = arith.constant 0 : i32
    return %arg0, %c0_i32 : i32, i32
  }
  func.func @transform_1(%arg0: i32) -> (i32, i32) {
    %c0_i32 = arith.constant 0 : i32
    %c0_i32_0 = arith.constant 0 : i32
    %c0_i32_1 = arith.constant 0 : i32
    return %c0_i32, %c0_i32_0 : i32, i32
  }
  func.func @transform_2(%arg0: i32) -> (i32, i32) {
    %c0_i32 = arith.constant 0 : i32
    %c0_i32_0 = arith.constant 0 : i32
    %c0_i32_1 = arith.constant 0 : i32
    return %c0_i32, %c0_i32_0 : i32, i32
  }
  func.func @transform_3(%arg0: i32) -> (i32, i32) {
    %c0_i32 = arith.constant 0 : i32
    %c0_i32_0 = arith.constant 0 : i32
    %c0_i32_1 = arith.constant 0 : i32
    return %c0_i32, %c0_i32_0 : i32, i32
  }
  func.func @transform_4(%arg0: i32) -> (i32, i32) {
    %c0_i32 = arith.constant 0 : i32
    %c0_i32_0 = arith.constant 0 : i32
    %c0_i32_1 = arith.constant 0 : i32
    return %c0_i32, %c0_i32_0 : i32, i32
  }
  func.func @transform_5(%arg0: i32) -> (i32, i32) {
    %c0_i32 = arith.constant 0 : i32
    %c0_i32_0 = arith.constant 0 : i32
    return %arg0, %c0_i32 : i32, i32
  }
}

</mosaic_0001>

<llo_original>
// kernel: basic_net_forward.1
$region0: #{basic_net_forward.1}
  #allocation0 [shape = 'u32[]', space=smem, size = 0x4, offset = 0x4, fixed_abs, tag = 'smem constant byte address 0x4 - core index']
  #allocation1 [shape = 'u32[144,128]{1,0:T(1,128)}', space=vmem, size = 0x12000, scoped, tag = 'internal scratch']
  %s0 = inlined_call_operand.vmem [shape: f32[8,128], index: 0, kind: input, shape index: {}]
  %s1 = inlined_call_operand.vmem [shape: f32[128,128], index: 1, kind: input, shape index: {}]
  %s2 = inlined_call_operand.vmem [shape: f32[1,128], index: 2, kind: input, shape index: {}]
  %s3 = inlined_call_operand.vmem [shape: f32[128,128], index: 3, kind: input, shape index: {}]
  %s4 = inlined_call_operand.vmem [shape: f32[1,128], index: 4, kind: input, shape index: {}]
  %s5 = inlined_call_operand.hbm [shape: f32[8,128], index: 5, kind: output, shape index: {}]
  %s6 = sld [smem:[#allocation0]]
  $region30: #{basic_net_forward.1} parent=0
    _
  %s8 = ssub.s32 1, %s6
  %s9 = scalar_select 0, %s8, %s6
  $region1: #{basic_net_forward.1} parent=0
    #allocation2 [shape = 'u8[4096]{0}', space=vmem, size = 0x1000, scoped, tag = 'output window, operand 0, single buffered']
    #allocation3 [shape = 's32[1]{0}', space=sflag, size = 0x4, scoped, tag = 'scoped memory for basic_net_forward.1']
    %10 = vsyncpa [#allocation3], 0
    // Predicated region
    $region2: #{basic_net_forward.1} parent=1 // pred_check
      _
    $region3: #{basic_net_forward.1} parent=1 // pred_check_branch
      %12 = sbr.rel (0) target = $region5
    $region4: #{basic_net_forward.1} parent=1 // pred_region
      _
    $region5: #{basic_net_forward.1} parent=1 // pred_fallthru
      _
    // Predicated region
    $region6: #{basic_net_forward.1} parent=1 // pred_check
      _
    $region7: #{basic_net_forward.1} parent=1 // pred_check_branch
      %14 = sbr.rel (0) target = $region9
    $region8: #{basic_net_forward.1} parent=1 // pred_region
      _
    $region9: #{basic_net_forward.1} parent=1 // pred_fallthru
      _
    // Predicated region
    $region10: #{basic_net_forward.1} parent=1 // pred_check
      _
    $region11: #{basic_net_forward.1} parent=1 // pred_check_branch
      %16 = sbr.rel (0) target = $region13
    $region12: #{basic_net_forward.1} parent=1 // pred_region
      _
    $region13: #{basic_net_forward.1} parent=1 // pred_fallthru
      _
    // Predicated region
    $region14: #{basic_net_forward.1} parent=1 // pred_check
      _
    $region15: #{basic_net_forward.1} parent=1 // pred_check_branch
      %18 = sbr.rel (0) target = $region17
    $region16: #{basic_net_forward.1} parent=1 // pred_region
      _
    $region17: #{basic_net_forward.1} parent=1 // pred_fallthru
      _
    // Predicated region
    $region18: #{basic_net_forward.1} parent=1 // pred_check
      _
    $region19: #{basic_net_forward.1} parent=1 // pred_check_branch
      %20 = sbr.rel (0) target = $region21
    $region20: #{basic_net_forward.1} parent=1 // pred_region
      _
    $region21: #{basic_net_forward.1} parent=1 // pred_fallthru
      _
    %v21 = vld [vmem:[%s0] sm:$0xff]
    %v22 = vld [vmem:[%s1] sm:$0xff]
    %v23 = vld [vmem:[%s1 + $0x8] sm:$0xff]
    %v24 = vld [vmem:[%s1 + $0x10] sm:$0xff]
    %v25 = vld [vmem:[%s1 + $0x18] sm:$0xff]
    %v26 = vld [vmem:[%s1 + $0x20] sm:$0xff]
    %v27 = vld [vmem:[%s1 + $0x28] sm:$0xff]
    %v28 = vld [vmem:[%s1 + $0x30] sm:$0xff]
    %v29 = vld [vmem:[%s1 + $0x38] sm:$0xff]
    %v30 = vld [vmem:[%s1 + $0x40] sm:$0xff]
    %v31 = vld [vmem:[%s1 + $0x48] sm:$0xff]
    %v32 = vld [vmem:[%s1 + $0x50] sm:$0xff]
    %v33 = vld [vmem:[%s1 + $0x58] sm:$0xff]
    %v34 = vld [vmem:[%s1 + $0x60] sm:$0xff]
    %v35 = vld [vmem:[%s1 + $0x68] sm:$0xff]
    %v36 = vld [vmem:[%s1 + $0x70] sm:$0xff]
    %v37 = vld [vmem:[%s1 + $0x78] sm:$0xff]
    %v38 = vld [vmem:[%s2] sm:$0x1]
    %v40 = vlaneseq
    %v41 = vshrl.u32 %v40, 7
    %v42 = vsub.s32 0, %v41
    %v43 = vrot.slane %v38, %v42
    %45 = vmatprep.subr.mxu0 0.0
    %46 = vmatpush1.msra.mxu0 %v37
    %47 = vmatprep.subr.mxu0 0.0
    %48 = vmatpush1.msra.mxu0 %v36
    %49 = vmatprep.subr.mxu0 0.0
    %50 = vmatpush1.msra.mxu0 %v35
    %51 = vmatprep.subr.mxu0 0.0
    %52 = vmatpush1.msra.mxu0 %v34
    %53 = vmatprep.subr.mxu0 0.0
    %54 = vmatpush1.msra.mxu0 %v33
    %55 = vmatprep.subr.mxu0 0.0
    %56 = vmatpush1.msra.mxu0 %v32
    %57 = vmatprep.subr.mxu0 0.0
    %58 = vmatpush1.msra.mxu0 %v31
    %59 = vmatprep.subr.mxu0 0.0
    %60 = vmatpush1.msra.mxu0 %v30
    %61 = vmatprep.subr.mxu0 0.0
    %62 = vmatpush1.msra.mxu0 %v29
    %63 = vmatprep.subr.mxu0 0.0
    %64 = vmatpush1.msra.mxu0 %v28
    %65 = vmatprep.subr.mxu0 0.0
    %66 = vmatpush1.msra.mxu0 %v27
    %67 = vmatprep.subr.mxu0 0.0
    %68 = vmatpush1.msra.mxu0 %v26
    %69 = vmatprep.subr.mxu0 0.0
    %70 = vmatpush1.msra.mxu0 %v25
    %71 = vmatprep.subr.mxu0 0.0
    %72 = vmatpush1.msra.mxu0 %v24
    %73 = vmatprep.subr.mxu0 0.0
    %74 = vmatpush1.msra.mxu0 %v23
    %75 = vmatprep.subr.mxu0 0.0
    %76 = vmatpush1.msra.mxu0 %v22
    %77 = vmatprep.subr.mxu0 0.0
    %78 = vmatpush2.msra.mxu0 0.0
    %79 = vmatprep.subr.mxu0 0.0
    %80 = vmatpush2.msra.mxu0 0.0
    %81 = vmatprep.subr.mxu0 0.0
    %82 = vmatpush2.msra.mxu0 0.0
    %83 = vmatprep.subr.mxu0 0.0
    %84 = vmatpush2.msra.mxu0 0.0
    %85 = vmatprep.subr.mxu0 0.0
    %86 = vmatpush2.msra.mxu0 0.0
    %87 = vmatprep.subr.mxu0 0.0
    %88 = vmatpush2.msra.mxu0 0.0
    %89 = vmatprep.subr.mxu0 0.0
    %90 = vmatpush2.msra.mxu0 0.0
    %91 = vmatprep.subr.mxu0 0.0
    %92 = vmatpush2.msra.mxu0 0.0
    %93 = vmatprep.subr.mxu0 0.0
    %94 = vmatpush2.msra.mxu0 0.0
    %95 = vmatprep.subr.mxu0 0.0
    %96 = vmatpush2.msra.mxu0 0.0
    %97 = vmatprep.subr.mxu0 0.0
    %98 = vmatpush2.msra.mxu0 0.0
    %99 = vmatprep.subr.mxu0 0.0
    %100 = vmatpush2.msra.mxu0 0.0
    %101 = vmatprep.subr.mxu0 0.0
    %102 = vmatpush2.msra.mxu0 0.0
    %103 = vmatprep.subr.mxu0 0.0
    %104 = vmatpush2.msra.mxu0 0.0
    %105 = vmatprep.subr.mxu0 0.0
    %106 = vmatpush2.msra.mxu0 0.0
    %107 = vmatprep.subr.mxu0 0.0
    %108 = vmatpush2.msra.mxu0 0.0
    %109 = vmatprep.mubr.f32.mxu0 0.0
    %110 = vmatmul.mubr.f32.gmra.mxu0 %v21
    %v111 = vpop.f32.mrf.mxu0
    %v112 = vadd.f32 %v43, %v111
    %v113 = vpop.f32.mrf.mxu0
    %114 = vdwg.mxu0
    %v115 = vmax.f32 %v112, 0.0
    %v116 = vld [vmem:[%s3] sm:$0xff]
    %v117 = vld [vmem:[%s3 + $0x8] sm:$0xff]
    %v118 = vld [vmem:[%s3 + $0x10] sm:$0xff]
    %v119 = vld [vmem:[%s3 + $0x18] sm:$0xff]
    %v120 = vld [vmem:[%s3 + $0x20] sm:$0xff]
    %v121 = vld [vmem:[%s3 + $0x28] sm:$0xff]
    %v122 = vld [vmem:[%s3 + $0x30] sm:$0xff]
    %v123 = vld [vmem:[%s3 + $0x38] sm:$0xff]
    %v124 = vld [vmem:[%s3 + $0x40] sm:$0xff]
    %v125 = vld [vmem:[%s3 + $0x48] sm:$0xff]
    %v126 = vld [vmem:[%s3 + $0x50] sm:$0xff]
    %v127 = vld [vmem:[%s3 + $0x58] sm:$0xff]
    %v128 = vld [vmem:[%s3 + $0x60] sm:$0xff]
    %v129 = vld [vmem:[%s3 + $0x68] sm:$0xff]
    %v130 = vld [vmem:[%s3 + $0x70] sm:$0xff]
    %v131 = vld [vmem:[%s3 + $0x78] sm:$0xff]
    %v132 = vld [vmem:[%s4] sm:$0x1]
    %v134 = vlaneseq
    %v135 = vshrl.u32 %v134, 7
    %v136 = vsub.s32 0, %v135
    %v137 = vrot.slane %v132, %v136
    %139 = vmatprep.subr.mxu0 0.0
    %140 = vmatpush1.msra.mxu0 %v131
    %141 = vmatprep.subr.mxu0 0.0
    %142 = vmatpush1.msra.mxu0 %v130
    %143 = vmatprep.subr.mxu0 0.0
    %144 = vmatpush1.msra.mxu0 %v129
    %145 = vmatprep.subr.mxu0 0.0
    %146 = vmatpush1.msra.mxu0 %v128
    %147 = vmatprep.subr.mxu0 0.0
    %148 = vmatpush1.msra.mxu0 %v127
    %149 = vmatprep.subr.mxu0 0.0
    %150 = vmatpush1.msra.mxu0 %v126
    %151 = vmatprep.subr.mxu0 0.0
    %152 = vmatpush1.msra.mxu0 %v125
    %153 = vmatprep.subr.mxu0 0.0
    %154 = vmatpush1.msra.mxu0 %v124
    %155 = vmatprep.subr.mxu0 0.0
    %156 = vmatpush1.msra.mxu0 %v123
    %157 = vmatprep.subr.mxu0 0.0
    %158 = vmatpush1.msra.mxu0 %v122
    %159 = vmatprep.subr.mxu0 0.0
    %160 = vmatpush1.msra.mxu0 %v121
    %161 = vmatprep.subr.mxu0 0.0
    %162 = vmatpush1.msra.mxu0 %v120
    %163 = vmatprep.subr.mxu0 0.0
    %164 = vmatpush1.msra.mxu0 %v119
    %165 = vmatprep.subr.mxu0 0.0
    %166 = vmatpush1.msra.mxu0 %v118
    %167 = vmatprep.subr.mxu0 0.0
    %168 = vmatpush1.msra.mxu0 %v117
    %169 = vmatprep.subr.mxu0 0.0
    %170 = vmatpush1.msra.mxu0 %v116
    %171 = vmatprep.subr.mxu0 0.0
    %172 = vmatpush2.msra.mxu0 0.0
    %173 = vmatprep.subr.mxu0 0.0
    %174 = vmatpush2.msra.mxu0 0.0
    %175 = vmatprep.subr.mxu0 0.0
    %176 = vmatpush2.msra.mxu0 0.0
    %177 = vmatprep.subr.mxu0 0.0
    %178 = vmatpush2.msra.mxu0 0.0
    %179 = vmatprep.subr.mxu0 0.0
    %180 = vmatpush2.msra.mxu0 0.0
    %181 = vmatprep.subr.mxu0 0.0
    %182 = vmatpush2.msra.mxu0 0.0
    %183 = vmatprep.subr.mxu0 0.0
    %184 = vmatpush2.msra.mxu0 0.0
    %185 = vmatprep.subr.mxu0 0.0
    %186 = vmatpush2.msra.mxu0 0.0
    %187 = vmatprep.subr.mxu0 0.0
    %188 = vmatpush2.msra.mxu0 0.0
    %189 = vmatprep.subr.mxu0 0.0
    %190 = vmatpush2.msra.mxu0 0.0
    %191 = vmatprep.subr.mxu0 0.0
    %192 = vmatpush2.msra.mxu0 0.0
    %193 = vmatprep.subr.mxu0 0.0
    %194 = vmatpush2.msra.mxu0 0.0
    %195 = vmatprep.subr.mxu0 0.0
    %196 = vmatpush2.msra.mxu0 0.0
    %197 = vmatprep.subr.mxu0 0.0
    %198 = vmatpush2.msra.mxu0 0.0
    %199 = vmatprep.subr.mxu0 0.0
    %200 = vmatpush2.msra.mxu0 0.0
    %201 = vmatprep.subr.mxu0 0.0
    %202 = vmatpush2.msra.mxu0 0.0
    %203 = vmatprep.mubr.f32.mxu0 0.0
    %204 = vmatmul.mubr.f32.gmra.mxu0 %v115
    %v205 = vpop.f32.mrf.mxu0
    %v206 = vadd.f32 %v137, %v205
    %v207 = vpop.f32.mrf.mxu0
    %208 = vdwg.mxu0
    %209 = vst [vmem:[#allocation2] sm:$0xff] %v206
    // Predicated region
    $region22: #{basic_net_forward.1} parent=1 // pred_check
      _
    $region23: #{basic_net_forward.1} parent=1 // pred_check_branch
      %211 = sbr.rel (0) target = $region25
    $region24: #{basic_net_forward.1} parent=1 // pred_region
      %s213 = ssub.s32 128, 128
      %214 = vsyncadd [#allocation3], %s213
      %s216 = sshll.u32 [#allocation2], 4
      %s217 = int_to_ptr.vmem [resolvable:$true] %s216
      %219 = dma.vmem_to_hbm [thread:$0]  %s217, 128, %s5, [#allocation3]
    $region25: #{basic_net_forward.1} parent=1 // pred_fallthru
      _
    // Predicated region
    $region26: #{basic_net_forward.1} parent=1 // pred_check
      _
    $region27: #{basic_net_forward.1} parent=1 // pred_check_branch
      %221 = sbr.rel (0) target = $region29
    $region28: #{basic_net_forward.1} parent=1 // pred_region
      %222 = dma.done [#allocation3], 128
    $region29: #{basic_net_forward.1} parent=1 // pred_fallthru
      _
    %223 = vsyncpa [#allocation3], 1

</llo_original>
